<compile_context>
chip_gen: v6e
topology: v6e:2x2x1
jax: 0.10.0
libtpu: 0.0.40
codegen_flags: <defaults>
</compile_context>

<pallas_src>
import jax
import jax.numpy as jnp
from jax.experimental import pallas as pl
from jax.experimental.pallas import tpu as pltpu


def _pos_embed_kernel(col_t_ref, row_t_ref, o_ref, slab_ref):
    # col_t_ref: (F, W)      = col_embed.weight[:W].T  (x_emb, pre-transposed)
    # row_t_ref: (F, H)      = row_embed.weight[:H].T  (y_emb, pre-transposed)
    # o_ref:     (Bt, F, HW) output block: channels [i*F, (i+1)*F) of Bt batches
    # slab_ref:  (F, HW)     VMEM scratch: the batch-invariant half-slab
    i = pl.program_id(0)            # 0 -> col half, 1 -> row half
    bb = pl.program_id(1)           # batch-block index (sequential)
    F, W = col_t_ref.shape
    H = row_t_ref.shape[1]
    HW = H * W
    Bt = o_ref.shape[0]

    # ---- one-time, vectorized slab build (per channel half, per core) ----
    @pl.when(bb == 0)
    def _build_slab():

        @pl.when(i == 0)
        def _col_half():
            # slab[:, h*W + w] = col_t[:, w]  =>  slab = col_t @ S,
            # S[w, l] = 1 iff (l % W) == w.  Compute l % W without vector
            # integer div/mod: floor((l + 0.5) / W) is exact for these ranges.
            w_idx = jax.lax.broadcasted_iota(jnp.int32, (W, HW), 0)
            l_idx = jax.lax.broadcasted_iota(jnp.int32, (W, HW), 1)
            l_div = jnp.floor(
                (l_idx.astype(jnp.float32) + 0.5) * (1.0 / W)).astype(jnp.int32)
            sel = (l_idx - l_div * W == w_idx).astype(col_t_ref.dtype)
            slab_ref[...] = jnp.dot(
                col_t_ref[...], sel,
                preferred_element_type=jnp.float32).astype(slab_ref.dtype)

        @pl.when(i == 1)
        def _row_half():
            # slab[:, h*W + w] = row_t[:, h]  =>  slab = row_t @ S,
            # S[h, l] = 1 iff (l // W) == h  <=>  0 <= l - h*W < W  (affine).
            h_idx = jax.lax.broadcasted_iota(jnp.int32, (H, HW), 0)
            l_idx = jax.lax.broadcasted_iota(jnp.int32, (H, HW), 1)
            d = l_idx - h_idx * W
            sel = ((d >= 0) & (d < W)).astype(row_t_ref.dtype)
            slab_ref[...] = jnp.dot(
                row_t_ref[...], sel,
                preferred_element_type=jnp.float32).astype(slab_ref.dtype)

    # ---- per-step: dense full-ref copies into all Bt batch slots ----------
    # Lane width HW, unmasked stores; fully hidden under the output DMA.
    for bt in range(Bt):            # Bt is tiny (<= 2-4), static unroll
        o_ref[bt] = slab_ref[...]


def position_embedding_learned(x, col_weight, row_weight, *, batch_tile=2):
    """Pallas equivalent of PositionEmbeddingLearned.forward.

    x:           (B, C, H, W)  -- only its shape is used (as in the reference)
    col_weight:  (50, F)       -- col_embed.weight
    row_weight:  (50, F)       -- row_embed.weight
    returns:     (B, 2F, H, W)
    """
    B, _, H, W = x.shape
    F = col_weight.shape[1]
    assert H <= row_weight.shape[0] and W <= col_weight.shape[0], (
        "H/W exceed the 50-entry embedding tables (same limit as the module)")
    # f32 sublane constraint for the (F, HW) half-channel block; use F % 16
    # (and bf16-aware tiling) if bf16 weights are intended.
    assert F % 8 == 0, "num_pos_feats must be a multiple of 8 (sublane tiling)"
    HW = H * W

    # Wrapper-side prep: slice to the rows actually used (this IS the
    # arange(W)/arange(H) embedding lookup) and pre-transpose so the kernel
    # needs no XLU relayout.
    col_t = col_weight[:W].T                 # (F, W)
    row_t = row_weight[:H].T                 # (F, H)

    # Batch coarsening: Bt batches per grid step (amortizes ~0.35 us/step).
    # Bt = 2 keeps double-buffered output (2*Bt*F*HW*4) + slab (F*HW*4)
    # ~12.9 MiB at module defaults -> fits v5e 16 MiB / v7x 32 MiB scoped VMEM.
    Bt = max(1, min(batch_tile, B))
    n_bb = pl.cdiv(B, Bt)

    out = pl.pallas_call(
        _pos_embed_kernel,
        out_shape=jax.ShapeDtypeStruct((B, 2 * F, HW), col_weight.dtype),
        grid=(2, n_bb),
        in_specs=[
            # tiny tables as single blocks; constant index map -> fetched once
            pl.BlockSpec((F, W), lambda i, b: (0, 0)),
            pl.BlockSpec((F, H), lambda i, b: (0, 0)),
        ],
        # lane-dense output block: Bt batches x F channels x H*W lanes
        out_specs=pl.BlockSpec((Bt, F, HW), lambda i, b: (b, i, 0)),
        scratch_shapes=[pltpu.VMEM((F, HW), col_weight.dtype)],
        compiler_params=pltpu.CompilerParams(
            dimension_semantics=("parallel", "arbitrary")),
    )(col_t, row_t)

    # (B, 2F, H*W) -> (B, 2F, H, W): contiguous, free reshape.
    return out.reshape(B, 2 * F, H, W)


def _reference(x, col_weight, row_weight):
    """Pure-JAX transcription of the PyTorch forward, for verification."""
    B, _, H, W = x.shape
    x_emb = col_weight[:W]                       # (W, F)
    y_emb = row_weight[:H]                       # (H, F)
    pos = jnp.concatenate(
        [jnp.broadcast_to(x_emb[None, :, :], (H, W, x_emb.shape[1])),
         jnp.broadcast_to(y_emb[:, None, :], (H, W, y_emb.shape[1]))],
        axis=-1)                                 # (H, W, 2F)
    pos = jnp.transpose(pos, (2, 0, 1))          # (2F, H, W)
    return jnp.broadcast_to(pos[None], (B,) + pos.shape)


if __name__ == "__main__":
    num_pos_feats = 32                 # small synthetic size (module default 256)
    B, C, H, W = 2, 4, 16, 16

    key = jax.random.PRNGKey(0)
    k_row, k_col, k_x = jax.random.split(key, 3)
    # nn.init.uniform_ -> U[0, 1)
    row_weight = jax.random.uniform(k_row, (50, num_pos_feats), dtype=jnp.float32)
    col_weight = jax.random.uniform(k_col, (50, num_pos_feats), dtype=jnp.float32)
    x = jax.random.normal(k_x, (B, C, H, W), dtype=jnp.float32)

    pos = position_embedding_learned(x, col_weight, row_weight)
    pos = jax.block_until_ready(pos)

    ref = _reference(x, col_weight, row_weight)
    assert pos.shape == (B, 2 * num_pos_feats, H, W), pos.shape
    assert jnp.allclose(pos, ref), "Pallas output mismatch vs reference"

    print("KERNEL_OK")
</pallas_src>

<mosaic_0001>
module attributes {stable_mosaic.version = 11 : i64} {
  func.func @_pos_embed_kernel(%arg0: i32, %arg1: i32, %arg2: memref<32x16xf32, #tpu.memory_space<vmem>>, %arg3: memref<32x16xf32, #tpu.memory_space<vmem>>, %arg4: memref<2x32x256xf32, #tpu.memory_space<vmem>>, %arg5: memref<32x256xf32, #tpu.memory_space<vmem>>) attributes {dimension_semantics = [#tpu.dimension_semantics<parallel>, #tpu.dimension_semantics<arbitrary>], iteration_bounds = array<i64: 2, 1>, scalar_prefetch = 0 : i64, scratch_operands = 1 : i64, tpu.core_type = #tpu.core_type<tc>, window_params = [{pipeline_mode = #tpu.pipeline_mode<synchronous>, transform_indices = @transform_0, window_bounds = array<i64: 32, 16>}, {pipeline_mode = #tpu.pipeline_mode<synchronous>, transform_indices = @transform_1, window_bounds = array<i64: 32, 16>}, {transform_indices = @transform_2, window_bounds = array<i64: 2, 32, 256>}]} {
    %c0_i32 = arith.constant 0 : i32
    %0 = arith.cmpi eq, %arg1, %c0_i32 : i32
    %1 = arith.extui %0 : i1 to i32
    %c0_i32_0 = arith.constant 0 : i32
    %2 = arith.cmpi ne, %1, %c0_i32_0 : i32
    scf.if %2 {
      %c0_i32_9 = arith.constant 0 : i32
      %11 = arith.cmpi eq, %arg0, %c0_i32_9 : i32
      %12 = arith.extui %11 : i1 to i32
      %c0_i32_10 = arith.constant 0 : i32
      %13 = arith.cmpi ne, %12, %c0_i32_10 : i32
      scf.if %13 {
        %17 = tpu.iota {dimensions = array<i32: 0>} : vector<16x256xi32>
        %18 = tpu.iota {dimensions = array<i32: 1>} : vector<16x256xi32>
        %19 = arith.sitofp %18 : vector<16x256xi32> to vector<16x256xf32>
        %cst = arith.constant 5.000000e-01 : f32
        %20 = vector.broadcast %cst : f32 to vector<16x256xf32>
        %21 = arith.addf %19, %20 : vector<16x256xf32>
        %cst_12 = arith.constant 6.250000e-02 : f32
        %22 = vector.broadcast %cst_12 : f32 to vector<16x256xf32>
        %23 = arith.mulf %21, %22 : vector<16x256xf32>
        %24 = math.floor %23 : vector<16x256xf32>
        %25 = arith.fptosi %24 : vector<16x256xf32> to vector<16x256xi32>
        %c16_i32 = arith.constant 16 : i32
        %26 = vector.broadcast %c16_i32 : i32 to vector<16x256xi32>
        %27 = arith.muli %25, %26 : vector<16x256xi32>
        %28 = arith.subi %18, %27 : vector<16x256xi32>
        %29 = arith.cmpi eq, %28, %17 : vector<16x256xi32>
        %30 = arith.extui %29 : vector<16x256xi1> to vector<16x256xi32>
        %31 = arith.sitofp %30 : vector<16x256xi32> to vector<16x256xf32>
        %c0_13 = arith.constant 0 : index
        %c0_14 = arith.constant 0 : index
        %32 = vector.load %arg2[%c0_13, %c0_14] : memref<32x16xf32, #tpu.memory_space<vmem>>, vector<32x16xf32>
        %cst_15 = arith.constant dense<0.000000e+00> : vector<32x256xf32>
        %33 = tpu.matmul %32, %31, %cst_15 {dimension_numbers = #tpu.dot_dimension_numbers<[1], [0], [0], [1], [0, 0, 1, 1], [], []>} : vector<32x16xf32>, vector<16x256xf32>, vector<32x256xf32> -> vector<32x256xf32>
        %c0_16 = arith.constant 0 : index
        %c0_17 = arith.constant 0 : index
        %34 = vector.load %arg5[%c0_16, %c0_17] : memref<32x256xf32, #tpu.memory_space<vmem>>, vector<32x256xf32>
        tpu.vector_store %arg5[%c0_16, %c0_17], %33 {strides = array<i32>} : memref<32x256xf32, #tpu.memory_space<vmem>>, vector<32x256xf32>,
      } else {
      }
      %c1_i32 = arith.constant 1 : i32
      %14 = arith.cmpi eq, %arg0, %c1_i32 : i32
      %15 = arith.extui %14 : i1 to i32
      %c0_i32_11 = arith.constant 0 : i32
      %16 = arith.cmpi ne, %15, %c0_i32_11 : i32
      scf.if %16 {
        %17 = tpu.iota {dimensions = array<i32: 0>} : vector<16x256xi32>
        %18 = tpu.iota {dimensions = array<i32: 1>} : vector<16x256xi32>
        %c16_i32 = arith.constant 16 : i32
        %19 = vector.broadcast %c16_i32 : i32 to vector<16x256xi32>
        %20 = arith.muli %17, %19 : vector<16x256xi32>
        %21 = arith.subi %18, %20 : vector<16x256xi32>
        %c0_i32_12 = arith.constant 0 : i32
        %22 = vector.broadcast %c0_i32_12 : i32 to vector<16x256xi32>
        %23 = arith.cmpi sge, %21, %22 : vector<16x256xi32>
        %c16_i32_13 = arith.constant 16 : i32
        %24 = vector.broadcast %c16_i32_13 : i32 to vector<16x256xi32>
        %25 = arith.cmpi slt, %21, %24 : vector<16x256xi32>
        %26 = arith.andi %23, %25 : vector<16x256xi1>
        %27 = arith.extui %26 : vector<16x256xi1> to vector<16x256xi32>
        %28 = arith.sitofp %27 : vector<16x256xi32> to vector<16x256xf32>
        %c0_14 = arith.constant 0 : index
        %c0_15 = arith.constant 0 : index
        %29 = vector.load %arg3[%c0_14, %c0_15] : memref<32x16xf32, #tpu.memory_space<vmem>>, vector<32x16xf32>
        %cst = arith.constant dense<0.000000e+00> : vector<32x256xf32>
        %30 = tpu.matmul %29, %28, %cst {dimension_numbers = #tpu.dot_dimension_numbers<[1], [0], [0], [1], [0, 0, 1, 1], [], []>} : vector<32x16xf32>, vector<16x256xf32>, vector<32x256xf32> -> vector<32x256xf32>
        %c0_16 = arith.constant 0 : index
        %c0_17 = arith.constant 0 : index
        %31 = vector.load %arg5[%c0_16, %c0_17] : memref<32x256xf32, #tpu.memory_space<vmem>>, vector<32x256xf32>
        tpu.vector_store %arg5[%c0_16, %c0_17], %30 {strides = array<i32>} : memref<32x256xf32, #tpu.memory_space<vmem>>, vector<32x256xf32>,
      } else {
      }
    } else {
    }
    %c0 = arith.constant 0 : index
    %c0_1 = arith.constant 0 : index
    %3 = vector.load %arg5[%c0, %c0_1] : memref<32x256xf32, #tpu.memory_space<vmem>>, vector<32x256xf32>
    %c0_2 = arith.constant 0 : index
    %c0_3 = arith.constant 0 : index
    %c0_4 = arith.constant 0 : index
    %4 = vector.load %arg4[%c0_2, %c0_3, %c0_4] : memref<2x32x256xf32, #tpu.memory_space<vmem>>, vector<1x32x256xf32>
    %5 = vector.shape_cast %4 : vector<1x32x256xf32> to vector<32x256xf32>
    %6 = vector.shape_cast %3 : vector<32x256xf32> to vector<1x32x256xf32>
    tpu.vector_store %arg4[%c0_2, %c0_3, %c0_4], %6 {strides = array<i32>} : memref<2x32x256xf32, #tpu.memory_space<vmem>>, vector<1x32x256xf32>,
    %c0_5 = arith.constant 0 : index
    %c0_6 = arith.constant 0 : index
    %7 = vector.load %arg5[%c0_5, %c0_6] : memref<32x256xf32, #tpu.memory_space<vmem>>, vector<32x256xf32>
    %c1 = arith.constant 1 : index
    %c0_7 = arith.constant 0 : index
    %c0_8 = arith.constant 0 : index
    %8 = vector.load %arg4[%c1, %c0_7, %c0_8] : memref<2x32x256xf32, #tpu.memory_space<vmem>>, vector<1x32x256xf32>
    %9 = vector.shape_cast %8 : vector<1x32x256xf32> to vector<32x256xf32>
    %10 = vector.shape_cast %7 : vector<32x256xf32> to vector<1x32x256xf32>
    tpu.vector_store %arg4[%c1, %c0_7, %c0_8], %10 {strides = array<i32>} : memref<2x32x256xf32, #tpu.memory_space<vmem>>, vector<1x32x256xf32>,
    return
  }
  func.func @transform_0(%arg0: i32, %arg1: i32) -> (i32, i32) {
    %c0_i32 = arith.constant 0 : i32
    %c0_i32_0 = arith.constant 0 : i32
    %c0_i32_1 = arith.constant 0 : i32
    return %c0_i32, %c0_i32_0 : i32, i32
  }
  func.func @transform_1(%arg0: i32, %arg1: i32) -> (i32, i32) {
    %c0_i32 = arith.constant 0 : i32
    %c0_i32_0 = arith.constant 0 : i32
    %c0_i32_1 = arith.constant 0 : i32
    return %c0_i32, %c0_i32_0 : i32, i32
  }
  func.func @transform_2(%arg0: i32, %arg1: i32) -> (i32, i32, i32) {
    %c0_i32 = arith.constant 0 : i32
    %c0_i32_0 = arith.constant 0 : i32
    return %arg1, %arg0, %c0_i32 : i32, i32, i32
  }
}

</mosaic_0001>

<llo_original>
// kernel: tpu_custom_call.1
$region0: #{tpu_custom_call.1}
  #allocation0 [shape = 'u32[]', space=smem, size = 0x4, offset = 0x4, fixed_abs, tag = 'smem constant byte address 0x4 - core index']
  #allocation1 [shape = 'u32[144,128]{1,0:T(1,128)}', space=vmem, size = 0x12000, scoped, tag = 'internal scratch']
  #allocation2 [shape = 'f32[32,256]{1,0:T(8,128)}', space=vmem, size = 0x8000, scoped, tag = 'scratch operand']
  #allocation5 [shape = 's32[]', space=sflag, size = 0x4, offset = 0, fixed_abs, tag = 'sflag constant byte address 0x0 - dummy sync flag']
  %s0 = inlined_call_operand.vmem [shape: f32[32,16], index: 0, kind: input, shape index: {}]
  %s1 = inlined_call_operand.vmem [shape: f32[32,16], index: 1, kind: input, shape index: {}]
  %s2 = inlined_call_operand.hbm [shape: f32[2,64,256], index: 2, kind: output, shape index: {}]
  %s3 = sld [smem:[#allocation0]]
  $region53: #{tpu_custom_call.1} parent=0
    _
  %s5 = ssub.s32 1, %s3
  %s6 = scalar_select 0, %s5, %s3
  $region1: #{tpu_custom_call.1} parent=0
    #allocation3 [shape = 'u8[131072]{0}', space=vmem, size = 0x20000, scoped, tag = 'output window, operand 0']
    #allocation4 [shape = 's32[2]{0}', space=sflag, size = 0x8, scoped, tag = 'scoped memory for tpu_custom_call.1']
    %7 = vsyncpa [#allocation4], 0
    %s8 = scalar_lea.sflag [#allocation4], 1
    %9 = vsyncpa %s8, 0
    loop: start=0, step=1, limit=4
    $region2: #{tpu_custom_call.1} parent=1 // loop_pre_header
      _
    $region3: #{tpu_custom_call.1} parent=1 // loop_header
      %s11 = sphi 0, %s15
      %p12 = scmp.ge.s32.totalorder %s11, 4
      %s18 = sphi 0, %s30
      %s19 = sphi 0, %s26
      %s20 = sphi 0, %s18
      %s21 = sphi 0, %s19
      %s22 = sphi 0, %s20
      %s23 = sphi 0, %s21
      %s31 = sphi 0, %s31
      %s33 = sphi 0, %s31
      %s34 = sphi 0, %s33
      %s48 = sphi 0, %s34
      %s52 = sphi 0, %s52
      %s54 = sphi 0, %s52
      %s55 = sphi 0, %s54
      %s69 = sphi 0, %s55
      %s77 = sphi 0, %s79
      %s80 = sphi 0, %s77
      %s81 = sphi 0, %s80
      %s97 = sphi 0, %s81
    $region4: #{tpu_custom_call.1} parent=1 // loop_header_branch
      %14 = sbr.rel (%p12) target = $region8
    $region5: #{tpu_custom_call.1} parent=1 // loop_body
      %s16 = ssub.s32 %s11, 1
      %s17 = ssub.s32 %s11, 2
      %s24 = sadd.s32 1, %s19
      %p25 = scmp.ge.s32.totalorder %s24, 1
      %s26 = scalar_select %p25, 0, %s24
      %s27 = sadd.s32 1, %s18
      %s28 = scalar_select %p25, %s27, %s18
      %p29 = scmp.ge.s32.totalorder %s28, 2
      %s30 = scalar_select %p29, 0, %s28
      %s32 = sadd.s32 %s31, 1
      %p35 = scmp.eq.s32.totalorder %s11, 1
      %p36 = scmp.ne.s32.totalorder %s31, %s33
      %p37 = scmp.eq.s32.totalorder %s11, 0
      %p38 = por %p36, %p37
      %p39 = scmp.ne.s32.totalorder %s31, %s33
      %p40 = scmp.eq.s32.totalorder %s16, 1
      %p41 = por %p39, %p40
      %p42 = scmp.ne.s32.totalorder %s33, %s34
      %p43 = scmp.eq.s32.totalorder %s16, 0
      %p44 = por %p42, %p43
      %p45 = scmp.ne.s32.totalorder %s33, %s34
      %p46 = scmp.eq.s32.totalorder %s17, 1
      %p47 = por %p45, %p46
      %p49 = scmp.ne.s32.totalorder %s34, %s48
      %p50 = scmp.eq.s32.totalorder %s17, 0
      %p51 = por %p49, %p50
      %s53 = sadd.s32 %s52, 1
      %p56 = scmp.eq.s32.totalorder %s11, 1
      %p57 = scmp.ne.s32.totalorder %s52, %s54
      %p58 = scmp.eq.s32.totalorder %s11, 0
      %p59 = por %p57, %p58
      %p60 = scmp.ne.s32.totalorder %s52, %s54
      %p61 = scmp.eq.s32.totalorder %s16, 1
      %p62 = por %p60, %p61
      %p63 = scmp.ne.s32.totalorder %s54, %s55
      %p64 = scmp.eq.s32.totalorder %s16, 0
      %p65 = por %p63, %p64
      %p66 = scmp.ne.s32.totalorder %s54, %s55
      %p67 = scmp.eq.s32.totalorder %s17, 1
      %p68 = por %p66, %p67
      %p70 = scmp.ne.s32.totalorder %s55, %s69
      %p71 = scmp.eq.s32.totalorder %s17, 0
      %p72 = por %p70, %p71
      %s73 = ssub.s32 %s19, %s26
      %s74 = ssub.s32 %s18, %s30
      %s75 = sor.u32 %s73, %s74
      %p76 = scmp.eq.s32.totalorder %s75, 0
      %s78 = sadd.s32 %s77, 1
      %s79 = scalar_select %p76, %s77, %s78
      %p82 = pneg %p76
      %p83 = scmp.eq.s32.totalorder %s11, 1
      %p84 = por %p82, %p83
      %p85 = scmp.ne.s32.totalorder %s77, %s80
      %p86 = scmp.eq.s32.totalorder %s11, 0
      %p87 = por %p85, %p86
      %p88 = scmp.ne.s32.totalorder %s77, %s80
      %p89 = scmp.eq.s32.totalorder %s16, 1
      %p90 = por %p88, %p89
      %p91 = scmp.ne.s32.totalorder %s80, %s81
      %p92 = scmp.eq.s32.totalorder %s16, 0
      %p93 = por %p91, %p92
      %p94 = scmp.ne.s32.totalorder %s80, %s81
      %p95 = scmp.eq.s32.totalorder %s17, 1
      %p96 = por %p94, %p95
      %p98 = scmp.ne.s32.totalorder %s81, %s97
      %p99 = scmp.eq.s32.totalorder %s17, 0
      %p100 = por %p98, %p99
      %p101 = scmp.le.s32.totalorder 1, %s11
      %p102 = scmp.lt.s32.totalorder %s11, 3
      %p103 = pnand %p101, %p102
      %p104 = pneg %p103
      // Predicated region
      $region9: #{tpu_custom_call.1} parent=5 // pred_check
        _
      $region10: #{tpu_custom_call.1} parent=5 // pred_check_branch
        %106 = sbr.rel (%p103) target = $region12
      $region11: #{tpu_custom_call.1} parent=5 // pred_region
        %s107 = ssub.s32 %s11, 1
        // Predicated region
        $region13: #{tpu_custom_call.1} parent=11 // pred_check
          %p108 = pneg %p44
        $region14: #{tpu_custom_call.1} parent=11 // pred_check_branch
          %110 = sbr.rel (%p108) target = $region16
        $region15: #{tpu_custom_call.1} parent=11 // pred_region
          _
        $region16: #{tpu_custom_call.1} parent=11 // pred_fallthru
          _
        // Predicated region
        $region17: #{tpu_custom_call.1} parent=11 // pred_check
          %p111 = pneg %p65
        $region18: #{tpu_custom_call.1} parent=11 // pred_check_branch
          %113 = sbr.rel (%p111) target = $region20
        $region19: #{tpu_custom_call.1} parent=11 // pred_region
          _
        $region20: #{tpu_custom_call.1} parent=11 // pred_fallthru
          _
      $region12: #{tpu_custom_call.1} parent=5 // pred_fallthru
        _
      %p114 = scmp.lt.s32.totalorder %s11, 2
      // Predicated region
      $region21: #{tpu_custom_call.1} parent=5 // pred_check
        %p115 = pneg %p114
      $region22: #{tpu_custom_call.1} parent=5 // pred_check_branch
        %117 = sbr.rel (%p115) target = $region24
      $region23: #{tpu_custom_call.1} parent=5 // pred_region
        _
      $region24: #{tpu_custom_call.1} parent=5 // pred_fallthru
        _
      %p118 = scmp.le.s32.totalorder 1, %s11
      %p119 = scmp.lt.s32.totalorder %s11, 3
      %p120 = pnand %p118, %p119
      %p121 = pneg %p120
      // Predicated region
      $region25: #{tpu_custom_call.1} parent=5 // pred_check
        _
      $region26: #{tpu_custom_call.1} parent=5 // pred_check_branch
        %123 = sbr.rel (%p120) target = $region28
      $region27: #{tpu_custom_call.1} parent=5 // pred_region
        %s124 = ssub.s32 %s11, 1
        %p125 = pneg %p44
        %p126 = pneg %p41
        %p127 = pneg %p65
        %p128 = pneg %p62
        %p129 = pneg %p93
        %p130 = pneg %p90
        %s131 = sand.u32 %s80, 1
        %s132 = scalar_lea.sflag [#allocation4], %s131
        %s133 = sand.u32 %s80, 1
        %s134 = smul.addr %s133, 128
        %s135 = scalar_lea.vmem [#allocation3], %s134
        %s136 = smul.u32 2, %s21
        %s137 = smul.u32 4, %s20
        %p138 = scmp.eq.s32.totalorder %s21, 0
        // Predicated region
        $region29: #{tpu_custom_call.1} parent=27 // pred_check
          %p139 = pneg %p138
        $region30: #{tpu_custom_call.1} parent=27 // pred_check_branch
          %141 = sbr.rel (%p139) target = $region32
        $region31: #{tpu_custom_call.1} parent=27 // pred_region
          %p142 = scmp.eq.s32.totalorder %s20, 0
          // Predicated region
          $region33: #{tpu_custom_call.1} parent=31 // pred_check
            %p143 = pneg %p142
          $region34: #{tpu_custom_call.1} parent=31 // pred_check_branch
            %145 = sbr.rel (%p143) target = $region36
          $region35: #{tpu_custom_call.1} parent=31 // pred_region
            %v146 = vlaneseq
            %v147 = vshrl.u32 %v146, 7
            %v148 = vadd.s32 %v147, 8
            %v149 = vlaneseq
            %v150 = vand.u32 %v149, 127
            %v151 = vadd.s32 %v150, 128
            %v152 = vcvt.s32.f32 %v150
            %v153 = vcvt.s32.f32 %v151
            %v154 = vadd.f32 %v152, 0.5
            %v155 = vadd.f32 %v153, 0.5
            %v156 = vmul.f32 %v154, 0.0625
            %v157 = vmul.f32 %v155, 0.0625
            %v158 = vfloor.f32 %v156
            %v159 = vfloor.f32 %v157
            %v160 = vcvt.f32.s32.to.zero.pseudo %v158
            %v161 = vcvt.f32.s32.to.zero.pseudo %v159
            %v162 = vmul.u32 %v160, 16
            %v163 = vmul.u32 %v161, 16
            %v164 = vsub.s32 %v150, %v162
            %v165 = vsub.s32 %v151, %v163
            %vm166 = vcmp.eq.s32.totalorder %v164, %v147
            %vm167 = vcmp.eq.s32.totalorder %v165, %v147
            %vm168 = vcmp.eq.s32.totalorder %v164, %v148
            %vm169 = vcmp.eq.s32.totalorder %v165, %v148
            %v170 = vsel %vm166, 1, 0
            %v171 = vsel %vm167, 1, 0
            %v172 = vsel %vm168, 1, 0
            %v173 = vsel %vm169, 1, 0
            %v174 = vcvt.s32.f32 %v170
            %v175 = vcvt.s32.f32 %v171
            %v176 = vcvt.s32.f32 %v172
            %v177 = vcvt.s32.f32 %v173
            %v178 = vld [vmem:[%s0] sm:$0xff]
            %v179 = vld [vmem:[%s0 + $0x8] sm:$0xff]
            %v180 = vld [vmem:[%s0 + $0x10] sm:$0xff]
            %v181 = vld [vmem:[%s0 + $0x18] sm:$0xff]
            %vm182 = vcmask 130048
            %v184 = vsel %vm182, %v178, 0
            %v187 = vsel %vm182, %v179, 0
            %v190 = vsel %vm182, %v180, 0
            %v193 = vsel %vm182, %v181, 0
            %195 = vmatprep.subr.mxu0 0.0
            %196 = vmatpush1.msra.mxu0 0.0
            %197 = vmatprep.subr.mxu0 0.0
            %198 = vmatpush1.msra.mxu0 0.0
            %199 = vmatprep.subr.mxu0 0.0
            %200 = vmatpush1.msra.mxu0 0.0
            %201 = vmatprep.subr.mxu0 0.0
            %202 = vmatpush1.msra.mxu0 0.0
            %203 = vmatprep.subr.mxu0 0.0
            %204 = vmatpush1.msra.mxu0 0.0
            %205 = vmatprep.subr.mxu0 0.0
            %206 = vmatpush1.msra.mxu0 0.0
            %207 = vmatprep.subr.mxu0 0.0
            %208 = vmatpush1.msra.mxu0 0.0
            %209 = vmatprep.subr.mxu0 0.0
            %210 = vmatpush1.msra.mxu0 0.0
            %211 = vmatprep.subr.mxu0 0.0
            %212 = vmatpush1.msra.mxu0 0.0
            %213 = vmatprep.subr.mxu0 0.0
            %214 = vmatpush1.msra.mxu0 0.0
            %215 = vmatprep.subr.mxu0 0.0
            %216 = vmatpush1.msra.mxu0 0.0
            %217 = vmatprep.subr.mxu0 0.0
            %218 = vmatpush1.msra.mxu0 0.0
            %219 = vmatprep.subr.mxu0 0.0
            %220 = vmatpush1.msra.mxu0 0.0
            %221 = vmatprep.subr.mxu0 0.0
            %222 = vmatpush1.msra.mxu0 0.0
            %223 = vmatprep.subr.mxu0 %v177
            %224 = vmatpush1.msra.mxu0 %v176
            %225 = vmatprep.subr.mxu0 %v175
            %226 = vmatpush1.msra.mxu0 %v174
            %227 = vmatprep.subr.mxu0 0.0
            %228 = vmatpush2.msra.mxu0 0.0
            %229 = vmatprep.subr.mxu0 0.0
            %230 = vmatpush2.msra.mxu0 0.0
            %231 = vmatprep.subr.mxu0 0.0
            %232 = vmatpush2.msra.mxu0 0.0
            %233 = vmatprep.subr.mxu0 0.0
            %234 = vmatpush2.msra.mxu0 0.0
            %235 = vmatprep.subr.mxu0 0.0
            %236 = vmatpush2.msra.mxu0 0.0
            %237 = vmatprep.subr.mxu0 0.0
            %238 = vmatpush2.msra.mxu0 0.0
            %239 = vmatprep.subr.mxu0 0.0
            %240 = vmatpush2.msra.mxu0 0.0
            %241 = vmatprep.subr.mxu0 0.0
            %242 = vmatpush2.msra.mxu0 0.0
            %243 = vmatprep.subr.mxu0 0.0
            %244 = vmatpush2.msra.mxu0 0.0
            %245 = vmatprep.subr.mxu0 0.0
            %246 = vmatpush2.msra.mxu0 0.0
            %247 = vmatprep.subr.mxu0 0.0
            %248 = vmatpush2.msra.mxu0 0.0
            %249 = vmatprep.subr.mxu0 0.0
            %250 = vmatpush2.msra.mxu0 0.0
            %251 = vmatprep.subr.mxu0 0.0
            %252 = vmatpush2.msra.mxu0 0.0
            %253 = vmatprep.subr.mxu0 0.0
            %254 = vmatpush2.msra.mxu0 0.0
            %255 = vmatprep.subr.mxu0 0.0
            %256 = vmatpush2.msra.mxu0 0.0
            %257 = vmatprep.subr.mxu0 0.0
            %258 = vmatpush2.msra.mxu0 0.0
            %259 = vmatprep.mubr.f32.mxu0 0.0
            %260 = vmatmul.mubr.f32.gmra.mxu0 %v184
            %v261 = vpop.f32.mrf.mxu0
            %v262 = vadd.f32 0.0, %v261
            %v263 = vpop.f32.mrf.mxu0
            %v264 = vadd.f32 0.0, %v263
            %265 = vmatprep.mubr.f32.mxu0 0.0
            %266 = vmatmul.mubr.f32.gmra.mxu0 %v187
            %v267 = vpop.f32.mrf.mxu0
            %v268 = vadd.f32 0.0, %v267
            %v269 = vpop.f32.mrf.mxu0
            %v270 = vadd.f32 0.0, %v269
            %271 = vmatprep.mubr.f32.mxu0 0.0
            %272 = vmatmul.mubr.f32.gmra.mxu0 %v190
            %v273 = vpop.f32.mrf.mxu0
            %v274 = vadd.f32 0.0, %v273
            %v275 = vpop.f32.mrf.mxu0
            %v276 = vadd.f32 0.0, %v275
            %277 = vmatprep.mubr.f32.mxu0 0.0
            %278 = vmatmul.mubr.f32.gmra.mxu0 %v193
            %v279 = vpop.f32.mrf.mxu0
            %v280 = vadd.f32 0.0, %v279
            %v281 = vpop.f32.mrf.mxu0
            %v282 = vadd.f32 0.0, %v281
            %283 = vdwg.mxu0
            %284 = vst [vmem:[#allocation2] sm:$0xff] %v262
            %285 = vst [vmem:[#allocation2 + $0x8] sm:$0xff] %v264
            %286 = vst [vmem:[#allocation2 + $0x10] sm:$0xff] %v268
            %287 = vst [vmem:[#allocation2 + $0x18] sm:$0xff] %v270
            %288 = vst [vmem:[#allocation2 + $0x20] sm:$0xff] %v274
            %289 = vst [vmem:[#allocation2 + $0x28] sm:$0xff] %v276
            %290 = vst [vmem:[#allocation2 + $0x30] sm:$0xff] %v280
            %291 = vst [vmem:[#allocation2 + $0x38] sm:$0xff] %v282
          $region36: #{tpu_custom_call.1} parent=31 // pred_fallthru
            _
          %p292 = scmp.eq.s32.totalorder %s20, 1
          // Predicated region
          $region37: #{tpu_custom_call.1} parent=31 // pred_check
            %p293 = pneg %p292
          $region38: #{tpu_custom_call.1} parent=31 // pred_check_branch
            %295 = sbr.rel (%p293) target = $region40
          $region39: #{tpu_custom_call.1} parent=31 // pred_region
            %v296 = vlaneseq
            %v297 = vshrl.u32 %v296, 7
            %v298 = vadd.s32 %v297, 8
            %v299 = vlaneseq
            %v300 = vand.u32 %v299, 127
            %v301 = vadd.s32 %v300, 128
            %v302 = vmul.u32 %v297, 16
            %v303 = vmul.u32 %v298, 16
            %v304 = vsub.s32 %v300, %v302
            %v305 = vsub.s32 %v301, %v302
            %v306 = vsub.s32 %v300, %v303
            %v307 = vsub.s32 %v301, %v303
            %vm308 = vcmp.ge.s32.totalorder %v304, 0
            %vm309 = vcmp.ge.s32.totalorder %v305, 0
            %vm310 = vcmp.ge.s32.totalorder %v306, 0
            %vm311 = vcmp.ge.s32.totalorder %v307, 0
            %vm312 = vcmp.lt.s32.totalorder %v304, 16
            %vm313 = vcmp.lt.s32.totalorder %v305, 16
            %vm314 = vcmp.lt.s32.totalorder %v306, 16
            %vm315 = vcmp.lt.s32.totalorder %v307, 16
            %vm316 = vmand %vm308, %vm312
            %vm317 = vmand %vm309, %vm313
            %vm318 = vmand %vm310, %vm314
            %vm319 = vmand %vm311, %vm315
            %v320 = vsel %vm316, 1, 0
            %v321 = vsel %vm317, 1, 0
            %v322 = vsel %vm318, 1, 0
            %v323 = vsel %vm319, 1, 0
            %v324 = vcvt.s32.f32 %v320
            %v325 = vcvt.s32.f32 %v321
            %v326 = vcvt.s32.f32 %v322
            %v327 = vcvt.s32.f32 %v323
            %v328 = vld [vmem:[%s1] sm:$0xff]
            %v329 = vld [vmem:[%s1 + $0x8] sm:$0xff]
            %v330 = vld [vmem:[%s1 + $0x10] sm:$0xff]
            %v331 = vld [vmem:[%s1 + $0x18] sm:$0xff]
            %vm332 = vcmask 130048
            %v334 = vsel %vm332, %v328, 0
            %v337 = vsel %vm332, %v329, 0
            %v340 = vsel %vm332, %v330, 0
            %v343 = vsel %vm332, %v331, 0
            %345 = vmatprep.subr.mxu0 0.0
            %346 = vmatpush1.msra.mxu0 0.0
            %347 = vmatprep.subr.mxu0 0.0
            %348 = vmatpush1.msra.mxu0 0.0
            %349 = vmatprep.subr.mxu0 0.0
            %350 = vmatpush1.msra.mxu0 0.0
            %351 = vmatprep.subr.mxu0 0.0
            %352 = vmatpush1.msra.mxu0 0.0
            %353 = vmatprep.subr.mxu0 0.0
            %354 = vmatpush1.msra.mxu0 0.0
            %355 = vmatprep.subr.mxu0 0.0
            %356 = vmatpush1.msra.mxu0 0.0
            %357 = vmatprep.subr.mxu0 0.0
            %358 = vmatpush1.msra.mxu0 0.0
            %359 = vmatprep.subr.mxu0 0.0
            %360 = vmatpush1.msra.mxu0 0.0
            %361 = vmatprep.subr.mxu0 0.0
            %362 = vmatpush1.msra.mxu0 0.0
            %363 = vmatprep.subr.mxu0 0.0
            %364 = vmatpush1.msra.mxu0 0.0
            %365 = vmatprep.subr.mxu0 0.0
            %366 = vmatpush1.msra.mxu0 0.0
            %367 = vmatprep.subr.mxu0 0.0
            %368 = vmatpush1.msra.mxu0 0.0
            %369 = vmatprep.subr.mxu0 0.0
            %370 = vmatpush1.msra.mxu0 0.0
            %371 = vmatprep.subr.mxu0 0.0
            %372 = vmatpush1.msra.mxu0 0.0
            %373 = vmatprep.subr.mxu0 %v327
            %374 = vmatpush1.msra.mxu0 %v326
            %375 = vmatprep.subr.mxu0 %v325
            %376 = vmatpush1.msra.mxu0 %v324
            %377 = vmatprep.subr.mxu0 0.0
            %378 = vmatpush2.msra.mxu0 0.0
            %379 = vmatprep.subr.mxu0 0.0
            %380 = vmatpush2.msra.mxu0 0.0
            %381 = vmatprep.subr.mxu0 0.0
            %382 = vmatpush2.msra.mxu0 0.0
            %383 = vmatprep.subr.mxu0 0.0
            %384 = vmatpush2.msra.mxu0 0.0
            %385 = vmatprep.subr.mxu0 0.0
            %386 = vmatpush2.msra.mxu0 0.0
            %387 = vmatprep.subr.mxu0 0.0
            %388 = vmatpush2.msra.mxu0 0.0
            %389 = vmatprep.subr.mxu0 0.0
            %390 = vmatpush2.msra.mxu0 0.0
            %391 = vmatprep.subr.mxu0 0.0
            %392 = vmatpush2.msra.mxu0 0.0
            %393 = vmatprep.subr.mxu0 0.0
            %394 = vmatpush2.msra.mxu0 0.0
            %395 = vmatprep.subr.mxu0 0.0
            %396 = vmatpush2.msra.mxu0 0.0
            %397 = vmatprep.subr.mxu0 0.0
            %398 = vmatpush2.msra.mxu0 0.0
            %399 = vmatprep.subr.mxu0 0.0
            %400 = vmatpush2.msra.mxu0 0.0
            %401 = vmatprep.subr.mxu0 0.0
            %402 = vmatpush2.msra.mxu0 0.0
            %403 = vmatprep.subr.mxu0 0.0
            %404 = vmatpush2.msra.mxu0 0.0
            %405 = vmatprep.subr.mxu0 0.0
            %406 = vmatpush2.msra.mxu0 0.0
            %407 = vmatprep.subr.mxu0 0.0
            %408 = vmatpush2.msra.mxu0 0.0
            %409 = vmatprep.mubr.f32.mxu0 0.0
            %410 = vmatmul.mubr.f32.gmra.mxu0 %v334
            %v411 = vpop.f32.mrf.mxu0
            %v412 = vadd.f32 0.0, %v411
            %v413 = vpop.f32.mrf.mxu0
            %v414 = vadd.f32 0.0, %v413
            %415 = vmatprep.mubr.f32.mxu0 0.0
            %416 = vmatmul.mubr.f32.gmra.mxu0 %v337
            %v417 = vpop.f32.mrf.mxu0
            %v418 = vadd.f32 0.0, %v417
            %v419 = vpop.f32.mrf.mxu0
            %v420 = vadd.f32 0.0, %v419
            %421 = vmatprep.mubr.f32.mxu0 0.0
            %422 = vmatmul.mubr.f32.gmra.mxu0 %v340
            %v423 = vpop.f32.mrf.mxu0
            %v424 = vadd.f32 0.0, %v423
            %v425 = vpop.f32.mrf.mxu0
            %v426 = vadd.f32 0.0, %v425
            %427 = vmatprep.mubr.f32.mxu0 0.0
            %428 = vmatmul.mubr.f32.gmra.mxu0 %v343
            %v429 = vpop.f32.mrf.mxu0
            %v430 = vadd.f32 0.0, %v429
            %v431 = vpop.f32.mrf.mxu0
            %v432 = vadd.f32 0.0, %v431
            %433 = vdwg.mxu0
            %434 = vst [vmem:[#allocation2] sm:$0xff] %v412
            %435 = vst [vmem:[#allocation2 + $0x8] sm:$0xff] %v414
            %436 = vst [vmem:[#allocation2 + $0x10] sm:$0xff] %v418
            %437 = vst [vmem:[#allocation2 + $0x18] sm:$0xff] %v420
            %438 = vst [vmem:[#allocation2 + $0x20] sm:$0xff] %v424
            %439 = vst [vmem:[#allocation2 + $0x28] sm:$0xff] %v426
            %440 = vst [vmem:[#allocation2 + $0x30] sm:$0xff] %v430
            %441 = vst [vmem:[#allocation2 + $0x38] sm:$0xff] %v432
          $region40: #{tpu_custom_call.1} parent=31 // pred_fallthru
            _
        $region32: #{tpu_custom_call.1} parent=27 // pred_fallthru
          _
        %v442 = vld [vmem:[#allocation2] sm:$0xff]
        %v443 = vld [vmem:[#allocation2 + $0x8] sm:$0xff]
        %v444 = vld [vmem:[#allocation2 + $0x10] sm:$0xff]
        %v445 = vld [vmem:[#allocation2 + $0x18] sm:$0xff]
        %v446 = vld [vmem:[#allocation2 + $0x20] sm:$0xff]
        %v447 = vld [vmem:[#allocation2 + $0x28] sm:$0xff]
        %v448 = vld [vmem:[#allocation2 + $0x30] sm:$0xff]
        %v449 = vld [vmem:[#allocation2 + $0x38] sm:$0xff]
        %450 = vst [vmem:[%s135] sm:$0xff] %v442
        %451 = vst [vmem:[%s135 + $0x8] sm:$0xff] %v443
        %452 = vst [vmem:[%s135 + $0x10] sm:$0xff] %v444
        %453 = vst [vmem:[%s135 + $0x18] sm:$0xff] %v445
        %454 = vst [vmem:[%s135 + $0x20] sm:$0xff] %v446
        %455 = vst [vmem:[%s135 + $0x28] sm:$0xff] %v447
        %456 = vst [vmem:[%s135 + $0x30] sm:$0xff] %v448
        %457 = vst [vmem:[%s135 + $0x38] sm:$0xff] %v449
        %v458 = vld [vmem:[#allocation2] sm:$0xff]
        %v459 = vld [vmem:[#allocation2 + $0x8] sm:$0xff]
        %v460 = vld [vmem:[#allocation2 + $0x10] sm:$0xff]
        %v461 = vld [vmem:[#allocation2 + $0x18] sm:$0xff]
        %v462 = vld [vmem:[#allocation2 + $0x20] sm:$0xff]
        %v463 = vld [vmem:[#allocation2 + $0x28] sm:$0xff]
        %v464 = vld [vmem:[#allocation2 + $0x30] sm:$0xff]
        %v465 = vld [vmem:[#allocation2 + $0x38] sm:$0xff]
        %s466 = scalar_lea.vmem %s135, 64 [#allocation3]
        %467 = vst [vmem:[%s466] sm:$0xff] %v458
        %468 = vst [vmem:[%s466 + $0x8] sm:$0xff] %v459
        %469 = vst [vmem:[%s466 + $0x10] sm:$0xff] %v460
        %470 = vst [vmem:[%s466 + $0x18] sm:$0xff] %v461
        %471 = vst [vmem:[%s466 + $0x20] sm:$0xff] %v462
        %472 = vst [vmem:[%s466 + $0x28] sm:$0xff] %v463
        %473 = vst [vmem:[%s466 + $0x30] sm:$0xff] %v464
        %474 = vst [vmem:[%s466 + $0x38] sm:$0xff] %v465
        %s475 = sand.u32 %s80, 1
        %s476 = scalar_lea.sflag [#allocation4], %s475
        %s477 = sand.u32 %s80, 1
        %s478 = smul.addr %s477, 128
        %s479 = scalar_lea.vmem [#allocation3], %s478
        // Predicated region
        $region41: #{tpu_custom_call.1} parent=27 // pred_check
          %p480 = pneg %p90
        $region42: #{tpu_custom_call.1} parent=27 // pred_check_branch
          %482 = sbr.rel (%p480) target = $region44
        $region43: #{tpu_custom_call.1} parent=27 // pred_region
          #allocation6 [shape = 'u32[6]{0}', space=smem, size = 0x18, scoped, tag = 'DMA stride descriptor']
          %s483 = smul.u32 2, %s21
          %s484 = smul.u32 4, %s20
          %s486 = ssub.s32 2048, 2048
          %487 = vsyncadd %s476, %s486
          %s488 = smul.addr %s484, 2
          %s489 = smul.addr %s483, 16
          %s490 = sadd.s32 %s488, %s489
          %s491 = smul.addr %s490, 128
          %s492 = scalar_lea.hbm %s2, %s491
          %s494 = sshll.u32 1, 14
          %s495 = sxor.u32 4294967295, %s494
          %s498 = sshll.u32 7, 18
          %s499 = sxor.u32 4294967295, %s498
          %s500 = sand.u32 0, %s499
          %s502 = sor.u32 %s500, 0
          %s503 = sshll.u32 %s479, 4
          %s504 = int_to_ptr.vmem [resolvable:$true] %s503
          %510 = sst [smem:[#allocation6]] 1024
          %s511 = scalar_lea.smem [#allocation6], 1
          %512 = sst [smem:[%s511]] 2048
          %s513 = scalar_lea.smem [#allocation6], 2
          %514 = sst [smem:[%s513]] 4
          %s515 = scalar_lea.smem [#allocation6], 3
          %516 = sst [smem:[%s515]] 256
          %s517 = scalar_lea.smem [#allocation6], 4
          %518 = sst [smem:[%s517]] 256
          %s519 = scalar_lea.smem [#allocation6], 5
          %520 = sst [smem:[%s519]] 16
          %522 = dma.general %s504, 2048, %s492, %s476, 131072, [#allocation6], %s502, 0
        $region44: #{tpu_custom_call.1} parent=27 // pred_fallthru
          _
      $region28: #{tpu_custom_call.1} parent=5 // pred_fallthru
        _
      %p523 = scmp.le.s32.totalorder 2, %s11
      // Predicated region
      $region45: #{tpu_custom_call.1} parent=5 // pred_check
        %p524 = pneg %p523
      $region46: #{tpu_custom_call.1} parent=5 // pred_check_branch
        %526 = sbr.rel (%p524) target = $region48
      $region47: #{tpu_custom_call.1} parent=5 // pred_region
        %s527 = ssub.s32 %s11, 2
        // Predicated region
        $region49: #{tpu_custom_call.1} parent=47 // pred_check
          %p528 = pneg %p96
        $region50: #{tpu_custom_call.1} parent=47 // pred_check_branch
          %530 = sbr.rel (%p528) target = $region52
        $region51: #{tpu_custom_call.1} parent=47 // pred_region
          %s531 = sand.u32 %s81, 1
          %s532 = scalar_lea.sflag [#allocation4], %s531
          %s533 = sand.u32 %s81, 1
          %s534 = smul.addr %s533, 128
          %s535 = scalar_lea.vmem [#allocation3], %s534
          %536 = dma.done %s532, 2048
        $region52: #{tpu_custom_call.1} parent=47 // pred_fallthru
          _
      $region48: #{tpu_custom_call.1} parent=5 // pred_fallthru
        _
    $region6: #{tpu_custom_call.1} parent=1 // loop_footer
      %s15 = sadd.s32 1, %s11
    $region7: #{tpu_custom_call.1} parent=1 // loop_footer_branch
      %10 = sbr.rel target = $region3
    $region8: #{tpu_custom_call.1} parent=1 // loop_exit
      _
    %537 = vsyncpa [#allocation4], 1
    %s538 = scalar_lea.sflag [#allocation4], 1
    %539 = vsyncpa %s538, 1

</llo_original>
